<compile_context>
chip_gen: v5e
topology: v5e:2x2
jax: 0.10.0
libtpu: 0.0.40
codegen_flags: <defaults>
</compile_context>

<pallas_src>
import jax
import jax.numpy as jnp
from jax.experimental import pallas as pl
from jax.experimental.pallas import tpu as pltpu

POWER = 3                                # matches PowerReLU(power=3) default
_LANE = 128
_TARGET_BLOCK_BYTES = 4 * 1024 * 1024    # ~4 MiB per block (mem-bound sweet spot)
_VMEM_LIMIT_BYTES = 32 * 1024 * 1024     # explicit: v5e scoped default (16 MiB) is
                                         # too small for 4x ~4 MiB double buffers


def _power_relu_kernel(x_ref, o_ref):
    # relu then integer power via repeated multiply: stays on the VPU,
    # no transcendentals.  Compute explicitly in f32 (cheap on f32 inputs,
    # avoids per-op bf16 pack/unpack on v5e), cast back on store.
    y = jnp.maximum(x_ref[...], 0).astype(jnp.float32)
    acc = y
    for _ in range(POWER - 1):
        acc = acc * y
    o_ref[...] = acc.astype(o_ref.dtype)


def _sublane_multiple(dtype) -> int:
    # Packed sublane multiple: 8 for 32-bit, 16 for 16-bit, 32 for 8-bit dtypes.
    itemsize = jnp.dtype(dtype).itemsize
    return max(8, 32 // max(itemsize, 1))


def _run_2d(x2d: jax.Array) -> jax.Array:
    """Run the elementwise kernel over a (rows, 128) slab (rows % sublane == 0)."""
    rows, lane = x2d.shape
    dtype = x2d.dtype
    itemsize = jnp.dtype(dtype).itemsize
    sub = _sublane_multiple(dtype)

    # Row tile targeting ~_TARGET_BLOCK_BYTES per block, aligned to the packed
    # sublane multiple.  Never collapses to tiny tiles for awkward row counts:
    # the grid uses pl.cdiv and Pallas handles the ragged last block.
    target_rows = max(sub, (_TARGET_BLOCK_BYTES // (lane * itemsize)) // sub * sub)
    tr = max(sub, (min(rows, target_rows) // sub) * sub)
    # If everything fits in one block but there is enough work to split, use
    # >=2 grid steps so both v7x TensorCores get work on the "parallel" axis.
    if pl.cdiv(rows, tr) < 2 and rows >= 4 * sub:
        tr = ((rows // 2 + sub - 1) // sub) * sub

    grid = (pl.cdiv(rows, tr),)

    return pl.pallas_call(
        _power_relu_kernel,
        out_shape=jax.ShapeDtypeStruct((rows, lane), dtype),
        grid=grid,
        in_specs=[pl.BlockSpec((tr, lane), lambda i: (i, 0))],
        out_specs=pl.BlockSpec((tr, lane), lambda i: (i, 0)),
        compiler_params=pltpu.CompilerParams(
            dimension_semantics=("parallel",),
            vmem_limit_bytes=_VMEM_LIMIT_BYTES,
        ),
    )(x2d)


def power_relu(x: jax.Array) -> jax.Array:
    """Elementwise relu(x)**POWER via a tiled, lane-dense Pallas kernel."""
    orig_shape = x.shape
    dtype = x.dtype
    total = x.size
    if total == 0:
        return x

    sub = _sublane_multiple(dtype)
    min_tile = sub * _LANE

    if total % min_tile == 0:
        # Fast path: direct reshape, zero extra HBM traffic in the wrapper.
        out2d = _run_2d(x.reshape(total // _LANE, _LANE))
        return out2d.reshape(orig_shape)

    # Ragged fallback: pad the flattened array up to a full (sub, 128) tile.
    # Zero padding is numerically safe: relu(0)**POWER == 0.
    rows_padded = ((pl.cdiv(total, _LANE) + sub - 1) // sub) * sub
    pad = rows_padded * _LANE - total
    x2d = jnp.pad(x.reshape(-1), (0, pad)).reshape(rows_padded, _LANE)
    out2d = _run_2d(x2d)
    return out2d.reshape(-1)[:total].reshape(orig_shape)


if __name__ == "__main__":
    key = jax.random.PRNGKey(0)
    k1, k2, k3, k4 = jax.random.split(key, 4)

    # NCHW-like activation map (fast path, single block)
    x1 = jax.random.normal(k1, (2, 4, 16, 16), dtype=jnp.float32)
    # larger input: multi-step "parallel" grid on the fast path
    x2 = jax.random.normal(k2, (4, 128, 1024), dtype=jnp.float32)
    # ragged element count: exercises the padded fallback path
    x3 = jax.random.normal(k3, (3, 5, 7), dtype=jnp.float32)
    # row count not divisible by the chosen tile: exercises the ragged last block
    x4 = jax.random.normal(k4, (5, 1024), dtype=jnp.float32)

    for x in (x1, x2, x3, x4):
        y = jax.block_until_ready(power_relu(x))
        y_ref = jnp.maximum(x, 0.0) ** POWER
        assert y.shape == x.shape and y.dtype == x.dtype
        assert jnp.allclose(y, y_ref, atol=1e-6, rtol=1e-6)

    print("KERNEL_OK")
</pallas_src>

<mosaic_0001>
module attributes {stable_mosaic.version = 11 : i64} {
  func.func @_power_relu_kernel(%arg0: i32, %arg1: memref<16x128xf32, #tpu.memory_space<vmem>>, %arg2: memref<16x128xf32, #tpu.memory_space<vmem>>) attributes {dimension_semantics = [#tpu.dimension_semantics<parallel>], iteration_bounds = array<i64: 1>, scalar_prefetch = 0 : i64, scratch_operands = 0 : i64, tpu.core_type = #tpu.core_type<tc>, window_params = [{transform_indices = @transform_0, window_bounds = array<i64: 16, 128>}, {transform_indices = @transform_1, window_bounds = array<i64: 16, 128>}]} {
    %c0 = arith.constant 0 : index
    %c0_0 = arith.constant 0 : index
    %0 = vector.load %arg1[%c0, %c0_0] : memref<16x128xf32, #tpu.memory_space<vmem>>, vector<16x128xf32>
    %cst = arith.constant 0.000000e+00 : f32
    %1 = vector.broadcast %cst : f32 to vector<16x128xf32>
    %2 = arith.maximumf %0, %1 : vector<16x128xf32>
    %3 = arith.mulf %2, %2 : vector<16x128xf32>
    %4 = arith.mulf %3, %2 : vector<16x128xf32>
    %c0_1 = arith.constant 0 : index
    %c0_2 = arith.constant 0 : index
    %5 = vector.load %arg2[%c0_1, %c0_2] : memref<16x128xf32, #tpu.memory_space<vmem>>, vector<16x128xf32>
    tpu.vector_store %arg2[%c0_1, %c0_2], %4 {strides = array<i32>} : memref<16x128xf32, #tpu.memory_space<vmem>>, vector<16x128xf32>,
    return
  }
  func.func @transform_0(%arg0: i32) -> (i32, i32) {
    %c0_i32 = arith.constant 0 : i32
    %c0_i32_0 = arith.constant 0 : i32
    return %arg0, %c0_i32 : i32, i32
  }
  func.func @transform_1(%arg0: i32) -> (i32, i32) {
    %c0_i32 = arith.constant 0 : i32
    %c0_i32_0 = arith.constant 0 : i32
    return %arg0, %c0_i32 : i32, i32
  }
}

</mosaic_0001>

<llo_original>
// kernel: tpu_custom_call.1
$region0: #{tpu_custom_call.1}
  #allocation0 [shape = 'u32[]', space=smem, size = 0x4, offset = 0x4, fixed_abs, tag = 'smem constant byte address 0x4 - core index']
  #allocation1 [shape = 'u32[72,128]{1,0:T(1,128)}', space=vmem, size = 0x9000, scoped, tag = 'internal scratch']
  %s0 = inlined_call_operand.hbm [shape: f32[16,128], index: 0, kind: input, shape index: {}]
  %s1 = inlined_call_operand.hbm [shape: f32[16,128], index: 1, kind: output, shape index: {}]
  %s2 = sld [smem:[#allocation0]]
  $region18: #{tpu_custom_call.1} parent=0
    _
  %s4 = ssub.s32 1, %s2
  %s5 = scalar_select 0, %s4, %s2
  $region1: #{tpu_custom_call.1} parent=0
    #allocation2 [shape = 'u8[8192]{0}', space=vmem, size = 0x2000, scoped, tag = 'input window, operand 0, single buffered']
    #allocation3 [shape = 's32[1]{0}', space=sflag, size = 0x4, scoped, tag = 'scoped memory for tpu_custom_call.1']
    #allocation4 [shape = 's32[1]{0}', space=sflag, size = 0x4, scoped, tag = 'scoped memory for tpu_custom_call.1']
    #allocation5 [shape = 'u8[8192]{0}', space=vmem, size = 0x2000, scoped, tag = 'output window, operand 0, single buffered']
    %6 = vsyncpa [#allocation3], 0
    %7 = vsyncpa [#allocation4], 0
    // Predicated region
    $region2: #{tpu_custom_call.1} parent=1 // pred_check
      _
    $region3: #{tpu_custom_call.1} parent=1 // pred_check_branch
      %9 = sbr.rel (0) target = $region5
    $region4: #{tpu_custom_call.1} parent=1 // pred_region
      %11 = vsyncadd [#allocation3], 0
      %s12 = sshll.u32 %s0, 4
      %s13 = int_to_ptr.hbm [resolvable:$true] %s12
      %s14 = sshll.u32 [#allocation2], 4
      %s15 = int_to_ptr.vmem [resolvable:$true] %s14
      %20 = dma.hbm_to_vmem [thread:$0]  %s13, 256, %s15, [#allocation3], 128, 128, 8
    $region5: #{tpu_custom_call.1} parent=1 // pred_fallthru
      _
    // Predicated region
    $region6: #{tpu_custom_call.1} parent=1 // pred_check
      _
    $region7: #{tpu_custom_call.1} parent=1 // pred_check_branch
      %22 = sbr.rel (0) target = $region9
    $region8: #{tpu_custom_call.1} parent=1 // pred_region
      %24 = dma.done [#allocation3], 256
    $region9: #{tpu_custom_call.1} parent=1 // pred_fallthru
      _
    %v25 = vld [vmem:[#allocation2] sm:$0xff]
    %v26 = vld [vmem:[#allocation2 + $0x8] sm:$0xff]
    %v27 = vmax.f32 %v25, 0.0
    %v28 = vmax.f32 %v26, 0.0
    %v29 = vmul.f32 %v27, %v27
    %v30 = vmul.f32 %v28, %v28
    %v31 = vmul.f32 %v29, %v27
    %v32 = vmul.f32 %v30, %v28
    %33 = vst [vmem:[#allocation5] sm:$0xff] %v31
    %34 = vst [vmem:[#allocation5 + $0x8] sm:$0xff] %v32
    // Predicated region
    $region10: #{tpu_custom_call.1} parent=1 // pred_check
      _
    $region11: #{tpu_custom_call.1} parent=1 // pred_check_branch
      %36 = sbr.rel (0) target = $region13
    $region12: #{tpu_custom_call.1} parent=1 // pred_region
      %38 = vsyncadd [#allocation4], 0
      %s39 = sshll.u32 [#allocation5], 4
      %s40 = int_to_ptr.vmem [resolvable:$true] %s39
      %s41 = sshll.u32 %s1, 4
      %s42 = int_to_ptr.hbm [resolvable:$true] %s41
      %47 = dma.vmem_to_hbm [thread:$0]  %s40, 256, %s42, [#allocation4], 128, 128, 8
    $region13: #{tpu_custom_call.1} parent=1 // pred_fallthru
      _
    // Predicated region
    $region14: #{tpu_custom_call.1} parent=1 // pred_check
      _
    $region15: #{tpu_custom_call.1} parent=1 // pred_check_branch
      %49 = sbr.rel (0) target = $region17
    $region16: #{tpu_custom_call.1} parent=1 // pred_region
      %51 = dma.done [#allocation4], 256
    $region17: #{tpu_custom_call.1} parent=1 // pred_fallthru
      _
    %52 = vsyncpa [#allocation3], 1
    %53 = vsyncpa [#allocation4], 1

</llo_original>
